<compile_context>
chip_gen: v7x
topology: tpu7x:2x2x1
jax: 0.10.0
libtpu: 0.0.40
codegen_flags: <defaults>
</compile_context>

<pallas_src>
import functools

import jax
import jax.numpy as jnp
from jax import lax
from jax.experimental import pallas as pl
from jax.experimental.pallas import tpu as pltpu


def _matmul_bias_relu_kernel(x_ref, w_ref, b_ref, o_ref, *, relu6):
    """Fused im2col-matmul + folded-BN bias + ReLU for one M-tile.

    x_ref: (TM, Kp)        im2col patch rows (K zero-padded to multiple of 8)
    w_ref: (Kp, Cout_pad)  conv weights with BN scale folded in, Cout padded to 128
    b_ref: (1, Cout_pad)   folded BN bias
    o_ref: (TM, Cout_pad)  lane-dense output tile (full 128-lane stores)
    """
    y = jnp.dot(x_ref[...], w_ref[...], preferred_element_type=jnp.float32)
    y = y + b_ref[...]
    y = jnp.maximum(y, 0.0)
    if relu6:
        y = jnp.minimum(y, 6.0)
    o_ref[...] = y.astype(o_ref.dtype)


def _round_up(v, m):
    return -(-v // m) * m


def conv_bn_relu_nhwc(x_nhwc, w_hwio, gamma, beta, running_mean, running_var,
                      *, stride=1, padding=0, eps=1e-5, relu6=False,
                      tile_m=256):
    """Conv2d(bias=False) + BatchNorm2d(eval) + ReLU(/6), NHWC in/out."""
    n, h, w, cin = x_nhwc.shape
    kh, kw, _, cout = w_hwio.shape
    ho = (h + 2 * padding - kh) // stride + 1
    wo = (w + 2 * padding - kw) // stride + 1

    # --- Fold eval-mode BatchNorm into the conv weights / a bias row. ---
    scale = (gamma / jnp.sqrt(running_var + eps)).astype(jnp.float32)
    w_folded = (w_hwio.astype(jnp.float32) * scale[None, None, None, :])
    bias = (beta - running_mean * scale).astype(jnp.float32)

    # --- im2col in the wrapper: (N*Ho*Wo, KH*KW*Cin) patch matrix. ---
    x_pad = jnp.pad(
        x_nhwc, ((0, 0), (padding, padding), (padding, padding), (0, 0)))
    patches = []
    for ikh in range(kh):
        for ikw in range(kw):
            patches.append(
                x_pad[:, ikh:ikh + (ho - 1) * stride + 1:stride,
                         ikw:ikw + (wo - 1) * stride + 1:stride, :])
    cols = jnp.concatenate(patches, axis=-1).reshape(n * ho * wo, kh * kw * cin)

    k = kh * kw * cin
    k_pad = _round_up(k, 8)            # aligned contracting dim
    cout_pad = _round_up(cout, 128)    # lane-dense output stores
    m = n * ho * wo
    tm = min(tile_m, _round_up(m, 8))
    m_pad = _round_up(m, tm)

    cols = jnp.pad(cols, ((0, m_pad - m), (0, k_pad - k)))
    w_mat = jnp.pad(w_folded.reshape(k, cout),
                    ((0, k_pad - k), (0, cout_pad - cout)))
    b_mat = jnp.pad(bias.reshape(1, cout), ((0, 0), (0, cout_pad - cout)))

    kernel = functools.partial(_matmul_bias_relu_kernel, relu6=relu6)

    out_padded = pl.pallas_call(
        kernel,
        out_shape=jax.ShapeDtypeStruct((m_pad, cout_pad), jnp.float32),
        grid_spec=pltpu.PrefetchScalarGridSpec(
            num_scalar_prefetch=0,
            grid=(m_pad // tm,),
            in_specs=[
                pl.BlockSpec((tm, k_pad), lambda i: (i, 0)),
                pl.BlockSpec((k_pad, cout_pad), lambda i: (0, 0)),
                pl.BlockSpec((1, cout_pad), lambda i: (0, 0)),
            ],
            out_specs=pl.BlockSpec((tm, cout_pad), lambda i: (i, 0)),
        ),
        compiler_params=pltpu.CompilerParams(
            dimension_semantics=("parallel",)),
    )(cols, w_mat, b_mat)

    return out_padded[:m, :cout].reshape(n, ho, wo, cout)


def conv_bn_relu_nchw(x_nchw, w_oihw, gamma, beta, running_mean, running_var,
                      *, stride=1, padding=0, eps=1e-5, relu6=False):
    """PyTorch-convention wrapper: NCHW input, (Cout,Cin,KH,KW) weights."""
    x_nhwc = jnp.transpose(x_nchw, (0, 2, 3, 1))
    w_hwio = jnp.transpose(w_oihw, (2, 3, 1, 0))
    y_nhwc = conv_bn_relu_nhwc(x_nhwc, w_hwio, gamma, beta,
                               running_mean, running_var,
                               stride=stride, padding=padding,
                               eps=eps, relu6=relu6)
    return jnp.transpose(y_nhwc, (0, 3, 1, 2))


def _reference_nchw(x_nchw, w_oihw, gamma, beta, running_mean, running_var,
                    *, stride, padding, eps=1e-5, relu6=False):
    """Pure-JAX/XLA reference with identical (eval-mode) semantics."""
    x_nhwc = jnp.transpose(x_nchw, (0, 2, 3, 1))
    w_hwio = jnp.transpose(w_oihw, (2, 3, 1, 0))
    y = lax.conv_general_dilated(
        x_nhwc, w_hwio, window_strides=(stride, stride),
        padding=((padding, padding), (padding, padding)),
        dimension_numbers=("NHWC", "HWIO", "NHWC"))
    scale = gamma / jnp.sqrt(running_var + eps)
    y = y * scale + (beta - running_mean * scale)
    y = jnp.maximum(y, 0.0)
    if relu6:
        y = jnp.minimum(y, 6.0)
    return jnp.transpose(y, (0, 3, 1, 2))


def _make_params(key, cin, cout, kh, kw):
    w_oihw = jax.random.normal(key, (cout, cin, kh, kw), dtype=jnp.float32) * 0.1
    gamma = 1.0 + 0.1 * jnp.arange(cout, dtype=jnp.float32)
    beta = 0.05 * jnp.arange(cout, dtype=jnp.float32)
    running_mean = 0.01 * jnp.arange(cout, dtype=jnp.float32)
    running_var = 1.0 + 0.02 * jnp.arange(cout, dtype=jnp.float32)
    return w_oihw, gamma, beta, running_mean, running_var


def _run_case(name, key, n, cin, h, w, cout, ksize, stride, padding):
    kx, kw_ = jax.random.split(key)
    x = jax.random.normal(kx, (n, cin, h, w), dtype=jnp.float32)
    w_oihw, gamma, beta, rmean, rvar = _make_params(kw_, cin, cout, ksize, ksize)

    out = conv_bn_relu_nchw(x, w_oihw, gamma, beta, rmean, rvar,
                            stride=stride, padding=padding)
    out = jax.block_until_ready(out)

    ref = _reference_nchw(x, w_oihw, gamma, beta, rmean, rvar,
                          stride=stride, padding=padding)
    assert out.shape == ref.shape, f"{name}: shape {out.shape} vs {ref.shape}"
    assert jnp.allclose(out, ref, atol=1e-4, rtol=1e-4), f"{name}: mismatch vs reference"
    return out


if __name__ == "__main__":
    key = jax.random.PRNGKey(0)
    k1, k2, k3 = jax.random.split(key, 3)

    # 1) Generic ConvBNReLU block (same small config as before):
    #    in=4, out=8, k=3, stride=1, pad=1, input (2, 4, 16, 16).
    _run_case("generic", k1, n=2, cin=4, h=16, w=16,
              cout=8, ksize=3, stride=1, padding=0 + 1)

    # 2) MSTCN_LPR.conv0 config: in=1, out=64, k=3, stride=2, pad=0 (small HxW).
    _run_case("conv0", k2, n=2, cin=1, h=16, w=16,
              cout=64, ksize=3, stride=2, padding=0)

    # 3) Pointwise 1x1 ConvBNReLU as used inside DWConvBNReLU: in=64, out=128.
    #    TODO(synk): the depthwise (groups=in_channels) half of DWConvBNReLU is
    #    not covered by this dense-conv kernel.
    _run_case("pointwise", k3, n=2, cin=64, h=8, w=8,
              cout=128, ksize=1, stride=1, padding=0)

    print("KERNEL_OK")
</pallas_src>

<mosaic_0001>
module attributes {stable_mosaic.version = 11 : i64} {
  func.func @_matmul_bias_relu_kernel(%arg0: i32, %arg1: memref<256x40xf32, #tpu.memory_space<vmem>>, %arg2: memref<40x128xf32, #tpu.memory_space<vmem>>, %arg3: memref<1x128xf32, #tpu.memory_space<vmem>>, %arg4: memref<256x128xf32, #tpu.memory_space<vmem>>) attributes {dimension_semantics = [#tpu.dimension_semantics<parallel>], iteration_bounds = array<i64: 2>, scalar_prefetch = 0 : i64, scratch_operands = 0 : i64, tpu.core_type = #tpu.core_type<tc>, window_params = [{transform_indices = @transform_0, window_bounds = array<i64: 256, 40>}, {pipeline_mode = #tpu.pipeline_mode<synchronous>, transform_indices = @transform_1, window_bounds = array<i64: 40, 128>}, {pipeline_mode = #tpu.pipeline_mode<synchronous>, transform_indices = @transform_2, window_bounds = array<i64: 1, 128>}, {transform_indices = @transform_3, window_bounds = array<i64: 256, 128>}]} {
    %c0 = arith.constant 0 : index
    %c0_0 = arith.constant 0 : index
    %0 = vector.load %arg1[%c0, %c0_0] : memref<256x40xf32, #tpu.memory_space<vmem>>, vector<256x40xf32>
    %c0_1 = arith.constant 0 : index
    %c0_2 = arith.constant 0 : index
    %1 = vector.load %arg2[%c0_1, %c0_2] : memref<40x128xf32, #tpu.memory_space<vmem>>, vector<40x128xf32>
    %cst = arith.constant dense<0.000000e+00> : vector<256x128xf32>
    %2 = tpu.matmul %0, %1, %cst {dimension_numbers = #tpu.dot_dimension_numbers<[1], [0], [0], [1], [0, 0, 1, 1], [], []>} : vector<256x40xf32>, vector<40x128xf32>, vector<256x128xf32> -> vector<256x128xf32>
    %c0_3 = arith.constant 0 : index
    %c0_4 = arith.constant 0 : index
    %3 = vector.load %arg3[%c0_3, %c0_4] : memref<1x128xf32, #tpu.memory_space<vmem>>, vector<1x128xf32>
    %4 = vector.broadcast %3 : vector<1x128xf32> to vector<256x128xf32>
    %5 = arith.addf %2, %4 : vector<256x128xf32>
    %cst_5 = arith.constant 0.000000e+00 : f32
    %6 = vector.broadcast %cst_5 : f32 to vector<256x128xf32>
    %7 = arith.maximumf %5, %6 : vector<256x128xf32>
    %c0_6 = arith.constant 0 : index
    %c0_7 = arith.constant 0 : index
    %8 = vector.load %arg4[%c0_6, %c0_7] : memref<256x128xf32, #tpu.memory_space<vmem>>, vector<256x128xf32>
    tpu.vector_store %arg4[%c0_6, %c0_7], %7 {strides = array<i32>} : memref<256x128xf32, #tpu.memory_space<vmem>>, vector<256x128xf32>,
    return
  }
  func.func @transform_0(%arg0: i32) -> (i32, i32) {
    %c0_i32 = arith.constant 0 : i32
    %c0_i32_0 = arith.constant 0 : i32
    return %arg0, %c0_i32 : i32, i32
  }
  func.func @transform_1(%arg0: i32) -> (i32, i32) {
    %c0_i32 = arith.constant 0 : i32
    %c0_i32_0 = arith.constant 0 : i32
    %c0_i32_1 = arith.constant 0 : i32
    return %c0_i32, %c0_i32_0 : i32, i32
  }
  func.func @transform_2(%arg0: i32) -> (i32, i32) {
    %c0_i32 = arith.constant 0 : i32
    %c0_i32_0 = arith.constant 0 : i32
    %c0_i32_1 = arith.constant 0 : i32
    return %c0_i32, %c0_i32_0 : i32, i32
  }
  func.func @transform_3(%arg0: i32) -> (i32, i32) {
    %c0_i32 = arith.constant 0 : i32
    %c0_i32_0 = arith.constant 0 : i32
    return %arg0, %c0_i32 : i32, i32
  }
}

</mosaic_0001>

<llo_original>
// kernel: tpu_custom_call.1
$region0: #{tpu_custom_call.1}
  #allocation0 [shape = 'u32[]', space=smem, size = 0x4, offset = 0x4, fixed_abs, tag = 'smem constant byte address 0x4 - core index']
  #allocation1 [shape = 'u32[144,128]{1,0:T(1,128)}', space=vmem, size = 0x12000, scoped, tag = 'internal scratch']
  %s0 = inlined_call_operand.vmem [shape: f32[512,40], index: 0, kind: input, shape index: {}]
  %s1 = inlined_call_operand.vmem [shape: f32[40,128], index: 1, kind: input, shape index: {}]
  %s2 = inlined_call_operand.vmem [shape: f32[1,128], index: 2, kind: input, shape index: {}]
  %s3 = inlined_call_operand.hbm [shape: f32[512,128], index: 3, kind: output, shape index: {}]
  %s4 = sld [smem:[#allocation0]]
  $region45: #{tpu_custom_call.1} parent=0
    _
  %s6 = ssub.s32 1, %s4
  %s7 = scalar_select 0, %s6, %s4
  $region1: #{tpu_custom_call.1} parent=0
    #allocation2 [shape = 'u8[262144]{0}', space=vmem, size = 0x40000, scoped, tag = 'output window, operand 0']
    #allocation3 [shape = 's32[2]{0}', space=sflag, size = 0x8, scoped, tag = 'scoped memory for tpu_custom_call.1']
    %8 = vsyncpa [#allocation3], 0
    %s9 = scalar_lea.sflag [#allocation3], 1
    %10 = vsyncpa %s9, 0
    loop: start=0, step=1, limit=4
    $region2: #{tpu_custom_call.1} parent=1 // loop_pre_header
      _
    $region3: #{tpu_custom_call.1} parent=1 // loop_header
      %s12 = sphi 0, %s16
      %p13 = scmp.ge.s32.totalorder %s12, 4
      %s22 = sphi 0, %s24
      %s25 = sphi 0, %s22
      %s26 = sphi 0, %s25
      %s42 = sphi 0, %s26
      %s46 = sphi 0, %s46
      %s48 = sphi 0, %s46
      %s49 = sphi 0, %s48
      %s63 = sphi 0, %s49
      %s67 = sphi 0, %s67
      %s69 = sphi 0, %s67
      %s70 = sphi 0, %s69
      %s84 = sphi 0, %s70
      %s90 = sphi 0, %s92
      %s93 = sphi 0, %s90
      %s94 = sphi 0, %s93
      %s110 = sphi 0, %s94
    $region4: #{tpu_custom_call.1} parent=1 // loop_header_branch
      %15 = sbr.rel (%p13) target = $region8
    $region5: #{tpu_custom_call.1} parent=1 // loop_body
      %s17 = ssub.s32 %s12, 1
      %s18 = ssub.s32 %s12, 2
      %s19 = sadd.s32 %s12, 1
      %s20 = ssub.s32 %s12, %s19
      %p21 = scmp.eq.s32.totalorder %s20, 0
      %s23 = sadd.s32 %s22, 1
      %s24 = scalar_select %p21, %s22, %s23
      %p27 = pneg %p21
      %p28 = scmp.eq.s32.totalorder %s12, 1
      %p29 = por %p27, %p28
      %p30 = scmp.ne.s32.totalorder %s22, %s25
      %p31 = scmp.eq.s32.totalorder %s12, 0
      %p32 = por %p30, %p31
      %p33 = scmp.ne.s32.totalorder %s22, %s25
      %p34 = scmp.eq.s32.totalorder %s17, 1
      %p35 = por %p33, %p34
      %p36 = scmp.ne.s32.totalorder %s25, %s26
      %p37 = scmp.eq.s32.totalorder %s17, 0
      %p38 = por %p36, %p37
      %p39 = scmp.ne.s32.totalorder %s25, %s26
      %p40 = scmp.eq.s32.totalorder %s18, 1
      %p41 = por %p39, %p40
      %p43 = scmp.ne.s32.totalorder %s26, %s42
      %p44 = scmp.eq.s32.totalorder %s18, 0
      %p45 = por %p43, %p44
      %s47 = sadd.s32 %s46, 1
      %p50 = scmp.eq.s32.totalorder %s12, 1
      %p51 = scmp.ne.s32.totalorder %s46, %s48
      %p52 = scmp.eq.s32.totalorder %s12, 0
      %p53 = por %p51, %p52
      %p54 = scmp.ne.s32.totalorder %s46, %s48
      %p55 = scmp.eq.s32.totalorder %s17, 1
      %p56 = por %p54, %p55
      %p57 = scmp.ne.s32.totalorder %s48, %s49
      %p58 = scmp.eq.s32.totalorder %s17, 0
      %p59 = por %p57, %p58
      %p60 = scmp.ne.s32.totalorder %s48, %s49
      %p61 = scmp.eq.s32.totalorder %s18, 1
      %p62 = por %p60, %p61
      %p64 = scmp.ne.s32.totalorder %s49, %s63
      %p65 = scmp.eq.s32.totalorder %s18, 0
      %p66 = por %p64, %p65
      %s68 = sadd.s32 %s67, 1
      %p71 = scmp.eq.s32.totalorder %s12, 1
      %p72 = scmp.ne.s32.totalorder %s67, %s69
      %p73 = scmp.eq.s32.totalorder %s12, 0
      %p74 = por %p72, %p73
      %p75 = scmp.ne.s32.totalorder %s67, %s69
      %p76 = scmp.eq.s32.totalorder %s17, 1
      %p77 = por %p75, %p76
      %p78 = scmp.ne.s32.totalorder %s69, %s70
      %p79 = scmp.eq.s32.totalorder %s17, 0
      %p80 = por %p78, %p79
      %p81 = scmp.ne.s32.totalorder %s69, %s70
      %p82 = scmp.eq.s32.totalorder %s18, 1
      %p83 = por %p81, %p82
      %p85 = scmp.ne.s32.totalorder %s70, %s84
      %p86 = scmp.eq.s32.totalorder %s18, 0
      %p87 = por %p85, %p86
      %s88 = ssub.s32 %s12, %s19
      %p89 = scmp.eq.s32.totalorder %s88, 0
      %s91 = sadd.s32 %s90, 1
      %s92 = scalar_select %p89, %s90, %s91
      %p95 = pneg %p89
      %p96 = scmp.eq.s32.totalorder %s12, 1
      %p97 = por %p95, %p96
      %p98 = scmp.ne.s32.totalorder %s90, %s93
      %p99 = scmp.eq.s32.totalorder %s12, 0
      %p100 = por %p98, %p99
      %p101 = scmp.ne.s32.totalorder %s90, %s93
      %p102 = scmp.eq.s32.totalorder %s17, 1
      %p103 = por %p101, %p102
      %p104 = scmp.ne.s32.totalorder %s93, %s94
      %p105 = scmp.eq.s32.totalorder %s17, 0
      %p106 = por %p104, %p105
      %p107 = scmp.ne.s32.totalorder %s93, %s94
      %p108 = scmp.eq.s32.totalorder %s18, 1
      %p109 = por %p107, %p108
      %p111 = scmp.ne.s32.totalorder %s94, %s110
      %p112 = scmp.eq.s32.totalorder %s18, 0
      %p113 = por %p111, %p112
      %p114 = scmp.le.s32.totalorder 1, %s12
      %p115 = scmp.lt.s32.totalorder %s12, 3
      %p116 = pnand %p114, %p115
      %p117 = pneg %p116
      // Predicated region
      $region9: #{tpu_custom_call.1} parent=5 // pred_check
        _
      $region10: #{tpu_custom_call.1} parent=5 // pred_check_branch
        %119 = sbr.rel (%p116) target = $region12
      $region11: #{tpu_custom_call.1} parent=5 // pred_region
        %s120 = ssub.s32 %s12, 1
        // Predicated region
        $region13: #{tpu_custom_call.1} parent=11 // pred_check
          %p121 = pneg %p59
        $region14: #{tpu_custom_call.1} parent=11 // pred_check_branch
          %123 = sbr.rel (%p121) target = $region16
        $region15: #{tpu_custom_call.1} parent=11 // pred_region
          _
        $region16: #{tpu_custom_call.1} parent=11 // pred_fallthru
          _
        // Predicated region
        $region17: #{tpu_custom_call.1} parent=11 // pred_check
          %p124 = pneg %p80
        $region18: #{tpu_custom_call.1} parent=11 // pred_check_branch
          %126 = sbr.rel (%p124) target = $region20
        $region19: #{tpu_custom_call.1} parent=11 // pred_region
          _
        $region20: #{tpu_custom_call.1} parent=11 // pred_fallthru
          _
      $region12: #{tpu_custom_call.1} parent=5 // pred_fallthru
        _
      %p127 = scmp.lt.s32.totalorder %s12, 2
      // Predicated region
      $region21: #{tpu_custom_call.1} parent=5 // pred_check
        %p128 = pneg %p127
      $region22: #{tpu_custom_call.1} parent=5 // pred_check_branch
        %130 = sbr.rel (%p128) target = $region24
      $region23: #{tpu_custom_call.1} parent=5 // pred_region
        // Predicated region
        $region25: #{tpu_custom_call.1} parent=23 // pred_check
          %p131 = pneg %p32
        $region26: #{tpu_custom_call.1} parent=23 // pred_check_branch
          %133 = sbr.rel (%p131) target = $region28
        $region27: #{tpu_custom_call.1} parent=23 // pred_region
          %s134 = smul.u32 32, %s12
          %p135 = scmp.lt.s32.totalorder %s134, 63
          %s136 = scalar_select %p135, %s134, 63
          %s137 = smul.addr %s136, 8
          %s138 = scalar_lea.vmem %s0, %s137
          %s139 = smul.u32 32, %s12
        $region28: #{tpu_custom_call.1} parent=23 // pred_fallthru
          _
      $region24: #{tpu_custom_call.1} parent=5 // pred_fallthru
        _
      %p140 = scmp.le.s32.totalorder 1, %s12
      %p141 = scmp.lt.s32.totalorder %s12, 3
      %p142 = pnand %p140, %p141
      %p143 = pneg %p142
      // Predicated region
      $region29: #{tpu_custom_call.1} parent=5 // pred_check
        _
      $region30: #{tpu_custom_call.1} parent=5 // pred_check_branch
        %145 = sbr.rel (%p142) target = $region32
      $region31: #{tpu_custom_call.1} parent=5 // pred_region
        %s146 = ssub.s32 %s12, 1
        %s147 = smul.u32 32, %s17
        %p148 = scmp.lt.s32.totalorder %s147, 63
        %s149 = scalar_select %p148, %s147, 63
        %s150 = smul.addr %s149, 8
        %s151 = scalar_lea.vmem %s0, %s150
        %p152 = pneg %p38
        %p153 = pneg %p35
        %p154 = pneg %p59
        %p155 = pneg %p56
        %p156 = pneg %p80
        %p157 = pneg %p77
        %p158 = pneg %p106
        %p159 = pneg %p103
        %s160 = sand.u32 %s93, 1
        %s161 = scalar_lea.sflag [#allocation3], %s160
        %s162 = sand.u32 %s93, 1
        %s163 = smul.addr %s162, 256
        %s164 = scalar_lea.vmem [#allocation2], %s163
        %s165 = smul.u32 32, %s17
        %p166 = scmp.lt.s32.totalorder %s165, 63
        %s167 = scalar_select %p166, %s165, 63
        %s168 = smul.addr %s167, 8
        %s169 = scalar_lea.vmem %s0, %s168
        %s170 = smul.u32 32, %s17
        %s171 = smul.u32 32, %s17
        %v172 = vld [vmem:[%s169] sm:$0xff]
        %v173 = vld [vmem:[%s169 + $0x8] sm:$0xff]
        %v174 = vld [vmem:[%s169 + $0x10] sm:$0xff]
        %v175 = vld [vmem:[%s169 + $0x18] sm:$0xff]
        %v176 = vld [vmem:[%s169 + $0x20] sm:$0xff]
        %v177 = vld [vmem:[%s169 + $0x28] sm:$0xff]
        %v178 = vld [vmem:[%s169 + $0x30] sm:$0xff]
        %v179 = vld [vmem:[%s169 + $0x38] sm:$0xff]
        %v180 = vld [vmem:[%s169 + $0x40] sm:$0xff]
        %v181 = vld [vmem:[%s169 + $0x48] sm:$0xff]
        %v182 = vld [vmem:[%s169 + $0x50] sm:$0xff]
        %v183 = vld [vmem:[%s169 + $0x58] sm:$0xff]
        %v184 = vld [vmem:[%s169 + $0x60] sm:$0xff]
        %v185 = vld [vmem:[%s169 + $0x68] sm:$0xff]
        %v186 = vld [vmem:[%s169 + $0x70] sm:$0xff]
        %v187 = vld [vmem:[%s169 + $0x78] sm:$0xff]
        %v188 = vld [vmem:[%s169 + $0x80] sm:$0xff]
        %v189 = vld [vmem:[%s169 + $0x88] sm:$0xff]
        %v190 = vld [vmem:[%s169 + $0x90] sm:$0xff]
        %v191 = vld [vmem:[%s169 + $0x98] sm:$0xff]
        %v192 = vld [vmem:[%s169 + $0xa0] sm:$0xff]
        %v193 = vld [vmem:[%s169 + $0xa8] sm:$0xff]
        %v194 = vld [vmem:[%s169 + $0xb0] sm:$0xff]
        %v195 = vld [vmem:[%s169 + $0xb8] sm:$0xff]
        %v196 = vld [vmem:[%s169 + $0xc0] sm:$0xff]
        %v197 = vld [vmem:[%s169 + $0xc8] sm:$0xff]
        %v198 = vld [vmem:[%s169 + $0xd0] sm:$0xff]
        %v199 = vld [vmem:[%s169 + $0xd8] sm:$0xff]
        %v200 = vld [vmem:[%s169 + $0xe0] sm:$0xff]
        %v201 = vld [vmem:[%s169 + $0xe8] sm:$0xff]
        %v202 = vld [vmem:[%s169 + $0xf0] sm:$0xff]
        %v203 = vld [vmem:[%s169 + $0xf8] sm:$0xff]
        %v204 = vld [vmem:[%s1] sm:$0xff]
        %v205 = vld [vmem:[%s1 + $0x8] sm:$0xff]
        %v206 = vld [vmem:[%s1 + $0x10] sm:$0xff]
        %v207 = vld [vmem:[%s1 + $0x18] sm:$0xff]
        %v208 = vld [vmem:[%s1 + $0x20] sm:$0xff]
        %v209 = vld [vmem:[%s2] sm:$0x1]
        %v211 = vlaneseq
        %v212 = vshrl.u32 %v211, 7
        %v213 = vsub.s32 0, %v212
        %v214 = vrot.slane %v209, %v213
        %vm216 = vcmask 326656
        %v218 = vsel %vm216, %v172, 0
        %v221 = vsel %vm216, %v173, 0
        %v224 = vsel %vm216, %v174, 0
        %v227 = vsel %vm216, %v175, 0
        %v230 = vsel %vm216, %v176, 0
        %v233 = vsel %vm216, %v177, 0
        %v236 = vsel %vm216, %v178, 0
        %v239 = vsel %vm216, %v179, 0
        %v242 = vsel %vm216, %v180, 0
        %v245 = vsel %vm216, %v181, 0
        %v248 = vsel %vm216, %v182, 0
        %v251 = vsel %vm216, %v183, 0
        %v254 = vsel %vm216, %v184, 0
        %v257 = vsel %vm216, %v185, 0
        %v260 = vsel %vm216, %v186, 0
        %v263 = vsel %vm216, %v187, 0
        %v266 = vsel %vm216, %v188, 0
        %v269 = vsel %vm216, %v189, 0
        %v272 = vsel %vm216, %v190, 0
        %v275 = vsel %vm216, %v191, 0
        %v278 = vsel %vm216, %v192, 0
        %v281 = vsel %vm216, %v193, 0
        %v284 = vsel %vm216, %v194, 0
        %v287 = vsel %vm216, %v195, 0
        %v290 = vsel %vm216, %v196, 0
        %v293 = vsel %vm216, %v197, 0
        %v296 = vsel %vm216, %v198, 0
        %v299 = vsel %vm216, %v199, 0
        %v302 = vsel %vm216, %v200, 0
        %v305 = vsel %vm216, %v201, 0
        %v308 = vsel %vm216, %v202, 0
        %v311 = vsel %vm216, %v203, 0
        %313 = vmatprep.subr.mxu0 0.0
        %314 = vmatpush1.msra.mxu0 %v204
        %315 = vmatprep.subr.mxu0 0.0
        %316 = vmatpush1.msra.mxu0 %v205
        %317 = vmatprep.subr.mxu0 0.0
        %318 = vmatpush1.msra.mxu0 %v206
        %319 = vmatprep.subr.mxu0 0.0
        %320 = vmatpush1.msra.mxu0 %v207
        %321 = vmatprep.subr.mxu0 0.0
        %322 = vmatpush1.msra.mxu0 %v208
        %323 = vmatprep.subr.mxu0 0.0
        %324 = vmatpush1.msra.mxu0 0.0
        %325 = vmatprep.subr.mxu0 0.0
        %326 = vmatpush1.msra.mxu0 0.0
        %327 = vmatprep.subr.mxu0 0.0
        %328 = vmatpush1.msra.mxu0 0.0
        %329 = vmatprep.subr.mxu0 0.0
        %330 = vmatpush1.msra.mxu0 0.0
        %331 = vmatprep.subr.mxu0 0.0
        %332 = vmatpush1.msra.mxu0 0.0
        %333 = vmatprep.subr.mxu0 0.0
        %334 = vmatpush1.msra.mxu0 0.0
        %335 = vmatprep.subr.mxu0 0.0
        %336 = vmatpush1.msra.mxu0 0.0
        %337 = vmatprep.subr.mxu0 0.0
        %338 = vmatpush1.msra.mxu0 0.0
        %339 = vmatprep.subr.mxu0 0.0
        %340 = vmatpush1.msra.mxu0 0.0
        %341 = vmatprep.subr.mxu0 0.0
        %342 = vmatpush1.msra.mxu0 0.0
        %343 = vmatprep.subr.mxu0 0.0
        %344 = vmatpush1.msra.mxu0 0.0
        %345 = vmatprep.subr.mxu0 0.0
        %346 = vmatpush1.msra.mxu0 0.0
        %347 = vmatprep.subr.mxu0 0.0
        %348 = vmatpush1.msra.mxu0 0.0
        %349 = vmatprep.subr.mxu0 0.0
        %350 = vmatpush1.msra.mxu0 0.0
        %351 = vmatprep.subr.mxu0 0.0
        %352 = vmatpush1.msra.mxu0 0.0
        %353 = vmatprep.subr.mxu0 0.0
        %354 = vmatpush1.msra.mxu0 0.0
        %355 = vmatprep.subr.mxu0 0.0
        %356 = vmatpush1.msra.mxu0 0.0
        %357 = vmatprep.subr.mxu0 0.0
        %358 = vmatpush1.msra.mxu0 0.0
        %359 = vmatprep.subr.mxu0 0.0
        %360 = vmatpush1.msra.mxu0 0.0
        %361 = vmatprep.subr.mxu0 0.0
        %362 = vmatpush1.msra.mxu0 0.0
        %363 = vmatprep.subr.mxu0 0.0
        %364 = vmatpush1.msra.mxu0 0.0
        %365 = vmatprep.subr.mxu0 0.0
        %366 = vmatpush1.msra.mxu0 0.0
        %367 = vmatprep.subr.mxu0 0.0
        %368 = vmatpush1.msra.mxu0 0.0
        %369 = vmatprep.subr.mxu0 0.0
        %370 = vmatpush1.msra.mxu0 0.0
        %371 = vmatprep.subr.mxu0 0.0
        %372 = vmatpush1.msra.mxu0 0.0
        %373 = vmatprep.subr.mxu0 0.0
        %374 = vmatpush1.msra.mxu0 0.0
        %375 = vmatprep.subr.mxu0 0.0
        %376 = vmatpush1.msra.mxu0 0.0
        %377 = vmatprep.mubr.f32.mxu0 0.0
        %378 = vmatmul.mubr.f32.gmra.mrb[0].mxu0 %v218
        %v379 = vpop.f32.mrb[0].mxu0
        %v380 = vadd.f32 %v214, %v379
        %v381 = vpop.f32.mrb[0].mxu0
        %382 = vmatprep.mubr.f32.mxu0 0.0
        %383 = vmatmul.mubr.f32.gmra.mrb[0].mxu0 %v221
        %v384 = vpop.f32.mrb[0].mxu0
        %v385 = vadd.f32 %v214, %v384
        %v386 = vpop.f32.mrb[0].mxu0
        %387 = vmatprep.mubr.f32.mxu0 0.0
        %388 = vmatmul.mubr.f32.gmra.mrb[0].mxu0 %v224
        %v389 = vpop.f32.mrb[0].mxu0
        %v390 = vadd.f32 %v214, %v389
        %v391 = vpop.f32.mrb[0].mxu0
        %392 = vmatprep.mubr.f32.mxu0 0.0
        %393 = vmatmul.mubr.f32.gmra.mrb[0].mxu0 %v227
        %v394 = vpop.f32.mrb[0].mxu0
        %v395 = vadd.f32 %v214, %v394
        %v396 = vpop.f32.mrb[0].mxu0
        %397 = vmatprep.mubr.f32.mxu0 0.0
        %398 = vmatmul.mubr.f32.gmra.mrb[0].mxu0 %v230
        %v399 = vpop.f32.mrb[0].mxu0
        %v400 = vadd.f32 %v214, %v399
        %v401 = vpop.f32.mrb[0].mxu0
        %402 = vmatprep.mubr.f32.mxu0 0.0
        %403 = vmatmul.mubr.f32.gmra.mrb[0].mxu0 %v233
        %v404 = vpop.f32.mrb[0].mxu0
        %v405 = vadd.f32 %v214, %v404
        %v406 = vpop.f32.mrb[0].mxu0
        %407 = vmatprep.mubr.f32.mxu0 0.0
        %408 = vmatmul.mubr.f32.gmra.mrb[0].mxu0 %v236
        %v409 = vpop.f32.mrb[0].mxu0
        %v410 = vadd.f32 %v214, %v409
        %v411 = vpop.f32.mrb[0].mxu0
        %412 = vmatprep.mubr.f32.mxu0 0.0
        %413 = vmatmul.mubr.f32.gmra.mrb[0].mxu0 %v239
        %v414 = vpop.f32.mrb[0].mxu0
        %v415 = vadd.f32 %v214, %v414
        %v416 = vpop.f32.mrb[0].mxu0
        %417 = vmatprep.mubr.f32.mxu0 0.0
        %418 = vmatmul.mubr.f32.gmra.mrb[0].mxu0 %v242
        %v419 = vpop.f32.mrb[0].mxu0
        %v420 = vadd.f32 %v214, %v419
        %v421 = vpop.f32.mrb[0].mxu0
        %422 = vmatprep.mubr.f32.mxu0 0.0
        %423 = vmatmul.mubr.f32.gmra.mrb[0].mxu0 %v245
        %v424 = vpop.f32.mrb[0].mxu0
        %v425 = vadd.f32 %v214, %v424
        %v426 = vpop.f32.mrb[0].mxu0
        %427 = vmatprep.mubr.f32.mxu0 0.0
        %428 = vmatmul.mubr.f32.gmra.mrb[0].mxu0 %v248
        %v429 = vpop.f32.mrb[0].mxu0
        %v430 = vadd.f32 %v214, %v429
        %v431 = vpop.f32.mrb[0].mxu0
        %432 = vmatprep.mubr.f32.mxu0 0.0
        %433 = vmatmul.mubr.f32.gmra.mrb[0].mxu0 %v251
        %v434 = vpop.f32.mrb[0].mxu0
        %v435 = vadd.f32 %v214, %v434
        %v436 = vpop.f32.mrb[0].mxu0
        %437 = vmatprep.mubr.f32.mxu0 0.0
        %438 = vmatmul.mubr.f32.gmra.mrb[0].mxu0 %v254
        %v439 = vpop.f32.mrb[0].mxu0
        %v440 = vadd.f32 %v214, %v439
        %v441 = vpop.f32.mrb[0].mxu0
        %442 = vmatprep.mubr.f32.mxu0 0.0
        %443 = vmatmul.mubr.f32.gmra.mrb[0].mxu0 %v257
        %v444 = vpop.f32.mrb[0].mxu0
        %v445 = vadd.f32 %v214, %v444
        %v446 = vpop.f32.mrb[0].mxu0
        %447 = vmatprep.mubr.f32.mxu0 0.0
        %448 = vmatmul.mubr.f32.gmra.mrb[0].mxu0 %v260
        %v449 = vpop.f32.mrb[0].mxu0
        %v450 = vadd.f32 %v214, %v449
        %v451 = vpop.f32.mrb[0].mxu0
        %452 = vmatprep.mubr.f32.mxu0 0.0
        %453 = vmatmul.mubr.f32.gmra.mrb[0].mxu0 %v263
        %v454 = vpop.f32.mrb[0].mxu0
        %v455 = vadd.f32 %v214, %v454
        %v456 = vpop.f32.mrb[0].mxu0
        %457 = vmatprep.mubr.f32.mxu0 0.0
        %458 = vmatmul.mubr.f32.gmra.mrb[0].mxu0 %v266
        %v459 = vpop.f32.mrb[0].mxu0
        %v460 = vadd.f32 %v214, %v459
        %v461 = vpop.f32.mrb[0].mxu0
        %462 = vmatprep.mubr.f32.mxu0 0.0
        %463 = vmatmul.mubr.f32.gmra.mrb[0].mxu0 %v269
        %v464 = vpop.f32.mrb[0].mxu0
        %v465 = vadd.f32 %v214, %v464
        %v466 = vpop.f32.mrb[0].mxu0
        %467 = vmatprep.mubr.f32.mxu0 0.0
        %468 = vmatmul.mubr.f32.gmra.mrb[0].mxu0 %v272
        %v469 = vpop.f32.mrb[0].mxu0
        %v470 = vadd.f32 %v214, %v469
        %v471 = vpop.f32.mrb[0].mxu0
        %472 = vmatprep.mubr.f32.mxu0 0.0
        %473 = vmatmul.mubr.f32.gmra.mrb[0].mxu0 %v275
        %v474 = vpop.f32.mrb[0].mxu0
        %v475 = vadd.f32 %v214, %v474
        %v476 = vpop.f32.mrb[0].mxu0
        %477 = vmatprep.mubr.f32.mxu0 0.0
        %478 = vmatmul.mubr.f32.gmra.mrb[0].mxu0 %v278
        %v479 = vpop.f32.mrb[0].mxu0
        %v480 = vadd.f32 %v214, %v479
        %v481 = vpop.f32.mrb[0].mxu0
        %482 = vmatprep.mubr.f32.mxu0 0.0
        %483 = vmatmul.mubr.f32.gmra.mrb[0].mxu0 %v281
        %v484 = vpop.f32.mrb[0].mxu0
        %v485 = vadd.f32 %v214, %v484
        %v486 = vpop.f32.mrb[0].mxu0
        %487 = vmatprep.mubr.f32.mxu0 0.0
        %488 = vmatmul.mubr.f32.gmra.mrb[0].mxu0 %v284
        %v489 = vpop.f32.mrb[0].mxu0
        %v490 = vadd.f32 %v214, %v489
        %v491 = vpop.f32.mrb[0].mxu0
        %492 = vmatprep.mubr.f32.mxu0 0.0
        %493 = vmatmul.mubr.f32.gmra.mrb[0].mxu0 %v287
        %v494 = vpop.f32.mrb[0].mxu0
        %v495 = vadd.f32 %v214, %v494
        %v496 = vpop.f32.mrb[0].mxu0
        %497 = vmatprep.mubr.f32.mxu0 0.0
        %498 = vmatmul.mubr.f32.gmra.mrb[0].mxu0 %v290
        %v499 = vpop.f32.mrb[0].mxu0
        %v500 = vadd.f32 %v214, %v499
        %v501 = vpop.f32.mrb[0].mxu0
        %502 = vmatprep.mubr.f32.mxu0 0.0
        %503 = vmatmul.mubr.f32.gmra.mrb[0].mxu0 %v293
        %v504 = vpop.f32.mrb[0].mxu0
        %v505 = vadd.f32 %v214, %v504
        %v506 = vpop.f32.mrb[0].mxu0
        %507 = vmatprep.mubr.f32.mxu0 0.0
        %508 = vmatmul.mubr.f32.gmra.mrb[0].mxu0 %v296
        %v509 = vpop.f32.mrb[0].mxu0
        %v510 = vadd.f32 %v214, %v509
        %v511 = vpop.f32.mrb[0].mxu0
        %512 = vmatprep.mubr.f32.mxu0 0.0
        %513 = vmatmul.mubr.f32.gmra.mrb[0].mxu0 %v299
        %v514 = vpop.f32.mrb[0].mxu0
        %v515 = vadd.f32 %v214, %v514
        %v516 = vpop.f32.mrb[0].mxu0
        %517 = vmatprep.mubr.f32.mxu0 0.0
        %518 = vmatmul.mubr.f32.gmra.mrb[0].mxu0 %v302
        %v519 = vpop.f32.mrb[0].mxu0
        %v520 = vadd.f32 %v214, %v519
        %v521 = vpop.f32.mrb[0].mxu0
        %522 = vmatprep.mubr.f32.mxu0 0.0
        %523 = vmatmul.mubr.f32.gmra.mrb[0].mxu0 %v305
        %v524 = vpop.f32.mrb[0].mxu0
        %v525 = vadd.f32 %v214, %v524
        %v526 = vpop.f32.mrb[0].mxu0
        %527 = vmatprep.mubr.f32.mxu0 0.0
        %528 = vmatmul.mubr.f32.gmra.mrb[0].mxu0 %v308
        %v529 = vpop.f32.mrb[0].mxu0
        %v530 = vadd.f32 %v214, %v529
        %v531 = vpop.f32.mrb[0].mxu0
        %532 = vmatprep.mubr.f32.mxu0 0.0
        %533 = vmatmul.mubr.f32.gmra.mrb[0].mxu0 %v311
        %v534 = vpop.f32.mrb[0].mxu0
        %v535 = vadd.f32 %v214, %v534
        %v536 = vpop.f32.mrb[0].mxu0
        %537 = vdwg.mxu0
        %v538 = vmax.f32 %v380, 0.0
        %v539 = vmax.f32 %v385, 0.0
        %v540 = vmax.f32 %v390, 0.0
        %v541 = vmax.f32 %v395, 0.0
        %v542 = vmax.f32 %v400, 0.0
        %v543 = vmax.f32 %v405, 0.0
        %v544 = vmax.f32 %v410, 0.0
        %v545 = vmax.f32 %v415, 0.0
        %v546 = vmax.f32 %v420, 0.0
        %v547 = vmax.f32 %v425, 0.0
        %v548 = vmax.f32 %v430, 0.0
        %v549 = vmax.f32 %v435, 0.0
        %v550 = vmax.f32 %v440, 0.0
        %v551 = vmax.f32 %v445, 0.0
        %v552 = vmax.f32 %v450, 0.0
        %v553 = vmax.f32 %v455, 0.0
        %v554 = vmax.f32 %v460, 0.0
        %v555 = vmax.f32 %v465, 0.0
        %v556 = vmax.f32 %v470, 0.0
        %v557 = vmax.f32 %v475, 0.0
        %v558 = vmax.f32 %v480, 0.0
        %v559 = vmax.f32 %v485, 0.0
        %v560 = vmax.f32 %v490, 0.0
        %v561 = vmax.f32 %v495, 0.0
        %v562 = vmax.f32 %v500, 0.0
        %v563 = vmax.f32 %v505, 0.0
        %v564 = vmax.f32 %v510, 0.0
        %v565 = vmax.f32 %v515, 0.0
        %v566 = vmax.f32 %v520, 0.0
        %v567 = vmax.f32 %v525, 0.0
        %v568 = vmax.f32 %v530, 0.0
        %v569 = vmax.f32 %v535, 0.0
        %570 = vst [vmem:[%s164] sm:$0xff] %v538
        %571 = vst [vmem:[%s164 + $0x8] sm:$0xff] %v539
        %572 = vst [vmem:[%s164 + $0x10] sm:$0xff] %v540
        %573 = vst [vmem:[%s164 + $0x18] sm:$0xff] %v541
        %574 = vst [vmem:[%s164 + $0x20] sm:$0xff] %v542
        %575 = vst [vmem:[%s164 + $0x28] sm:$0xff] %v543
        %576 = vst [vmem:[%s164 + $0x30] sm:$0xff] %v544
        %577 = vst [vmem:[%s164 + $0x38] sm:$0xff] %v545
        %578 = vst [vmem:[%s164 + $0x40] sm:$0xff] %v546
        %579 = vst [vmem:[%s164 + $0x48] sm:$0xff] %v547
        %580 = vst [vmem:[%s164 + $0x50] sm:$0xff] %v548
        %581 = vst [vmem:[%s164 + $0x58] sm:$0xff] %v549
        %582 = vst [vmem:[%s164 + $0x60] sm:$0xff] %v550
        %583 = vst [vmem:[%s164 + $0x68] sm:$0xff] %v551
        %584 = vst [vmem:[%s164 + $0x70] sm:$0xff] %v552
        %585 = vst [vmem:[%s164 + $0x78] sm:$0xff] %v553
        %586 = vst [vmem:[%s164 + $0x80] sm:$0xff] %v554
        %587 = vst [vmem:[%s164 + $0x88] sm:$0xff] %v555
        %588 = vst [vmem:[%s164 + $0x90] sm:$0xff] %v556
        %589 = vst [vmem:[%s164 + $0x98] sm:$0xff] %v557
        %590 = vst [vmem:[%s164 + $0xa0] sm:$0xff] %v558
        %591 = vst [vmem:[%s164 + $0xa8] sm:$0xff] %v559
        %592 = vst [vmem:[%s164 + $0xb0] sm:$0xff] %v560
        %593 = vst [vmem:[%s164 + $0xb8] sm:$0xff] %v561
        %594 = vst [vmem:[%s164 + $0xc0] sm:$0xff] %v562
        %595 = vst [vmem:[%s164 + $0xc8] sm:$0xff] %v563
        %596 = vst [vmem:[%s164 + $0xd0] sm:$0xff] %v564
        %597 = vst [vmem:[%s164 + $0xd8] sm:$0xff] %v565
        %598 = vst [vmem:[%s164 + $0xe0] sm:$0xff] %v566
        %599 = vst [vmem:[%s164 + $0xe8] sm:$0xff] %v567
        %600 = vst [vmem:[%s164 + $0xf0] sm:$0xff] %v568
        %601 = vst [vmem:[%s164 + $0xf8] sm:$0xff] %v569
        %s602 = sand.u32 %s93, 1
        %s603 = scalar_lea.sflag [#allocation3], %s602
        %s604 = sand.u32 %s93, 1
        %s605 = smul.addr %s604, 256
        %s606 = scalar_lea.vmem [#allocation2], %s605
        // Predicated region
        $region33: #{tpu_custom_call.1} parent=31 // pred_check
          %p607 = pneg %p103
        $region34: #{tpu_custom_call.1} parent=31 // pred_check_branch
          %609 = sbr.rel (%p607) target = $region36
        $region35: #{tpu_custom_call.1} parent=31 // pred_region
          %s610 = smul.u32 32, %s17
          %s612 = ssub.s32 4096, 4096
          %613 = vsyncadd %s603, %s612
          %s614 = smul.addr %s610, 128
          %s615 = scalar_lea.hbm %s3, %s614
          %s616 = sshll.u32 %s606, 4
          %s617 = int_to_ptr.vmem [resolvable:$true] %s616
          %622 = dma.vmem_to_hbm [thread:$0]  %s617, 4096, %s615, %s603, 128, 128, 8
        $region36: #{tpu_custom_call.1} parent=31 // pred_fallthru
          _
      $region32: #{tpu_custom_call.1} parent=5 // pred_fallthru
        _
      %p623 = scmp.le.s32.totalorder 2, %s12
      // Predicated region
      $region37: #{tpu_custom_call.1} parent=5 // pred_check
        %p624 = pneg %p623
      $region38: #{tpu_custom_call.1} parent=5 // pred_check_branch
        %626 = sbr.rel (%p624) target = $region40
      $region39: #{tpu_custom_call.1} parent=5 // pred_region
        %s627 = ssub.s32 %s12, 2
        // Predicated region
        $region41: #{tpu_custom_call.1} parent=39 // pred_check
          %p628 = pneg %p109
        $region42: #{tpu_custom_call.1} parent=39 // pred_check_branch
          %630 = sbr.rel (%p628) target = $region44
        $region43: #{tpu_custom_call.1} parent=39 // pred_region
          %s631 = sand.u32 %s94, 1
          %s632 = scalar_lea.sflag [#allocation3], %s631
          %s633 = sand.u32 %s94, 1
          %s634 = smul.addr %s633, 256
          %s635 = scalar_lea.vmem [#allocation2], %s634
          %636 = dma.done %s632, 4096
        $region44: #{tpu_custom_call.1} parent=39 // pred_fallthru
          _
      $region40: #{tpu_custom_call.1} parent=5 // pred_fallthru
        _
    $region6: #{tpu_custom_call.1} parent=1 // loop_footer
      %s16 = sadd.s32 1, %s12
    $region7: #{tpu_custom_call.1} parent=1 // loop_footer_branch
      %11 = sbr.rel target = $region3
    $region8: #{tpu_custom_call.1} parent=1 // loop_exit
      _
    %637 = vsyncpa [#allocation3], 1
    %s638 = scalar_lea.sflag [#allocation3], 1
    %639 = vsyncpa %s638, 1

</llo_original>
